<compile_context>
chip_gen: v6e
topology: v6e:2x2x1
jax: 0.10.0
libtpu: 0.0.40
codegen_flags: <defaults>
</compile_context>

<pallas_src>
import jax
import jax.numpy as jnp
from jax.experimental import pallas as pl
from jax.experimental.pallas import tpu as pltpu


def _ceil_div(a, b):
    return -(-a // b)


def _l1_distance_loss_kernel(pred_ref, lab_ref, inv_ref, out_ref):
    i = pl.program_id(0)   # batch-tile index
    j = pl.program_id(1)   # word-pair-plane chunk index

    # Zero the resident (1,1) accumulator on the very first grid step.
    @pl.when((i == 0) & (j == 0))
    def _():
        out_ref[...] = jnp.zeros_like(out_ref)

    pred = pred_ref[...]          # (bt, ss_t) f32, lane-dense
    lab = lab_ref[...]            # (bt, ss_t) f32
    inv = inv_ref[...]            # (bt, 1)    f32: 1/len^2 (0 for len==0 / padding)

    # Masked L1 (entries with label == -1 ignored).  Pure VPU work.
    diff = jnp.where(lab == -1.0, 0.0, jnp.abs(pred - lab))

    # Per-sentence row sum (lane reduce), scale by 1/len^2, then collapse the
    # batch-tile (sublane reduce) into a scalar partial accumulated in-place.
    row = jnp.sum(diff, axis=-1, keepdims=True)                  # (bt, 1)
    out_ref[...] += jnp.sum(row * inv, axis=0, keepdims=True)    # (1, 1)


def l1_distance_loss(predictions, label_batch, length_batch,
                     *, target_tile_bytes=2 * 1024 * 1024):
    """Pallas implementation of L1DistanceLoss.forward.

    Args:
      predictions:  (B, S, S) float32
      label_batch:  (B, S, S) float32, entries == -1 are ignored
      length_batch: (B,)      int sentence lengths

    Returns:
      (batch_loss, total_sents): float32 scalars.
    """
    B, S, _ = predictions.shape
    SS = S * S

    # Lane-dense flattened layout (free contiguous reshape in the wrapper).
    preds = predictions.reshape(B, SS).astype(jnp.float32)
    labs = label_batch.reshape(B, SS).astype(jnp.float32)
    lengths = length_batch.astype(jnp.int32)

    # Wrapper-side scalar prep: sentence count and guarded 1/len^2.
    total_sents = jnp.sum(lengths != 0).astype(jnp.float32)
    len_f = lengths.astype(jnp.float32)
    inv_sq_len = jnp.where(lengths != 0, 1.0 / (len_f * len_f), 0.0)

    # ---- tile selection -----------------------------------------------------
    row_bytes = SS * 4
    if row_bytes <= target_tile_bytes:
        # Whole word-pair plane fits on the lane axis of one tile.
        ss_t = SS
        ss_pad = SS
        bt_cap = max(8, ((target_tile_bytes // row_bytes) // 8) * 8)
    else:
        # Huge sentences: split the plane into lane chunks (multiples of 128).
        bt_cap = 8
        ss_cap = max(128, ((target_tile_bytes // (8 * 4)) // 128) * 128)
        n_ss = _ceil_div(SS, ss_cap)
        ss_t = _ceil_div(_ceil_div(SS, n_ss), 128) * 128
        ss_pad = n_ss * ss_t

    if B <= bt_cap:
        bt = B                     # single batch tile; block dim == full dim
        b_pad = B
    else:
        nb = _ceil_div(B, bt_cap)  # balanced batch tiles (multiple of 8 rows)
        bt = _ceil_div(_ceil_div(B, nb), 8) * 8
        b_pad = nb * bt

    # Zero padding is loss-neutral: pred=0 & label=0 -> |0-0|=0; inv=0 rows add 0.
    if (b_pad, ss_pad) != (B, SS):
        preds = jnp.pad(preds, ((0, b_pad - B), (0, ss_pad - SS)))
        labs = jnp.pad(labs, ((0, b_pad - B), (0, ss_pad - SS)))
    if b_pad != B:
        inv_sq_len = jnp.pad(inv_sq_len, ((0, b_pad - B),))
    inv_sq_len = inv_sq_len.reshape(b_pad, 1)

    grid = (b_pad // bt, ss_pad // ss_t)

    cost = pl.CostEstimate(
        flops=6 * B * SS,
        transcendentals=0,
        bytes_accessed=2 * B * SS * 4 + B * 4 + 4,
    )

    loss_sum = pl.pallas_call(
        _l1_distance_loss_kernel,
        out_shape=jax.ShapeDtypeStruct((1, 1), jnp.float32),
        grid_spec=pltpu.PrefetchScalarGridSpec(
            num_scalar_prefetch=0,
            grid=grid,
            in_specs=[
                pl.BlockSpec((bt, ss_t), lambda i, j: (i, j)),  # predictions
                pl.BlockSpec((bt, ss_t), lambda i, j: (i, j)),  # labels
                pl.BlockSpec((bt, 1), lambda i, j: (i, 0)),     # 1/len^2
            ],
            out_specs=pl.BlockSpec((1, 1), lambda i, j: (0, 0)),
        ),
        compiler_params=pltpu.CompilerParams(
            dimension_semantics=("arbitrary", "arbitrary")),  # both axes reduce
        cost_estimate=cost,
    )(preds, labs, inv_sq_len)

    batch_loss = jnp.where(total_sents > 0.0,
                           loss_sum[0, 0] / total_sents,
                           jnp.float32(0.0))
    return batch_loss, total_sents


def _reference(predictions, label_batch, length_batch):
    labels_1s = (label_batch != -1).astype(jnp.float32)
    pm = predictions * labels_1s
    lm = label_batch * labels_1s
    total_sents = jnp.sum(length_batch != 0).astype(jnp.float32)
    sq_len = (length_batch.astype(jnp.float32)) ** 2
    loss_per_sent = jnp.sum(jnp.abs(pm - lm), axis=(1, 2))
    norm = loss_per_sent / sq_len
    batch_loss = jnp.where(total_sents > 0, jnp.sum(norm) / total_sents, 0.0)
    return batch_loss, total_sents


if __name__ == "__main__":
    key = jax.random.PRNGKey(0)
    B, S = 2, 16
    k1, k2 = jax.random.split(key)

    predictions = jax.random.normal(k1, (B, S, S), dtype=jnp.float32)
    labels = jnp.abs(jax.random.normal(k2, (B, S, S), dtype=jnp.float32)) * 3.0

    # Sentence lengths; pad positions beyond the length get label -1 (ignored).
    lengths = jnp.array([12, 9], dtype=jnp.int32)
    idx = jnp.arange(S)
    valid = (idx[None, :, None] < lengths[:, None, None]) & \
            (idx[None, None, :] < lengths[:, None, None])
    label_batch = jnp.where(valid, labels, -1.0).astype(jnp.float32)

    batch_loss, total_sents = l1_distance_loss(predictions, label_batch, lengths)
    jax.block_until_ready((batch_loss, total_sents))

    ref_loss, ref_total = _reference(predictions, label_batch, lengths)
    assert jnp.allclose(batch_loss, ref_loss, rtol=1e-5, atol=1e-5), (batch_loss, ref_loss)
    assert jnp.allclose(total_sents, ref_total), (total_sents, ref_total)

    print("KERNEL_OK")
</pallas_src>

<mosaic_0001>
module attributes {stable_mosaic.version = 11 : i64} {
  func.func @_l1_distance_loss_kernel(%arg0: i32, %arg1: i32, %arg2: memref<2x256xf32, #tpu.memory_space<vmem>>, %arg3: memref<2x256xf32, #tpu.memory_space<vmem>>, %arg4: memref<2x1xf32, #tpu.memory_space<vmem>>, %arg5: memref<1x1xf32, #tpu.memory_space<vmem>>) attributes {dimension_semantics = [#tpu.dimension_semantics<arbitrary>, #tpu.dimension_semantics<arbitrary>], iteration_bounds = array<i64: 1, 1>, scalar_prefetch = 0 : i64, scratch_operands = 0 : i64, tpu.core_type = #tpu.core_type<tc>, window_params = [{transform_indices = @transform_0, window_bounds = array<i64: 2, 256>}, {transform_indices = @transform_1, window_bounds = array<i64: 2, 256>}, {transform_indices = @transform_2, window_bounds = array<i64: 2, 1>}, {pipeline_mode = #tpu.pipeline_mode<synchronous>, transform_indices = @transform_3, window_bounds = array<i64: 1, 1>}]} {
    %c0_i32 = arith.constant 0 : i32
    %0 = arith.cmpi eq, %arg0, %c0_i32 : i32
    %c0_i32_0 = arith.constant 0 : i32
    %1 = arith.cmpi eq, %arg1, %c0_i32_0 : i32
    %2 = arith.andi %0, %1 : i1
    %3 = arith.extui %2 : i1 to i32
    %c0_i32_1 = arith.constant 0 : i32
    %4 = arith.cmpi ne, %3, %c0_i32_1 : i32
    scf.if %4 {
      %cst_14 = arith.constant 0.000000e+00 : f32
      %22 = vector.broadcast %cst_14 : f32 to vector<1x1xf32>
      %c0_15 = arith.constant 0 : index
      %c0_16 = arith.constant 0 : index
      %23 = vector.load %arg5[%c0_15, %c0_16] : memref<1x1xf32, #tpu.memory_space<vmem>>, vector<1x1xf32>
      tpu.vector_store %arg5[%c0_15, %c0_16], %22 {strides = array<i32>} : memref<1x1xf32, #tpu.memory_space<vmem>>, vector<1x1xf32>,
    } else {
    }
    %c0 = arith.constant 0 : index
    %c0_2 = arith.constant 0 : index
    %5 = vector.load %arg2[%c0, %c0_2] : memref<2x256xf32, #tpu.memory_space<vmem>>, vector<2x256xf32>
    %c0_3 = arith.constant 0 : index
    %c0_4 = arith.constant 0 : index
    %6 = vector.load %arg3[%c0_3, %c0_4] : memref<2x256xf32, #tpu.memory_space<vmem>>, vector<2x256xf32>
    %c0_5 = arith.constant 0 : index
    %c0_6 = arith.constant 0 : index
    %7 = vector.load %arg4[%c0_5, %c0_6] : memref<2x1xf32, #tpu.memory_space<vmem>>, vector<2x1xf32>
    %cst = arith.constant -1.000000e+00 : f32
    %8 = vector.broadcast %cst : f32 to vector<2x256xf32>
    %9 = arith.cmpf oeq, %6, %8 : vector<2x256xf32>
    %10 = arith.subf %5, %6 : vector<2x256xf32>
    %11 = math.absf %10 : vector<2x256xf32>
    %cst_7 = arith.constant 0.000000e+00 : f32
    %12 = vector.broadcast %cst_7 : f32 to vector<2x256xf32>
    %13 = arith.select %9, %12, %11 : vector<2x256xi1>, vector<2x256xf32>
    %cst_8 = arith.constant dense<0.000000e+00> : vector<2xf32>
    %14 = vector.multi_reduction <add>, %13, %cst_8 [1] : vector<2x256xf32> to vector<2xf32>
    %15 = vector.shape_cast %14 : vector<2xf32> to vector<2x1xf32>
    %c0_9 = arith.constant 0 : index
    %c0_10 = arith.constant 0 : index
    %16 = vector.load %arg5[%c0_9, %c0_10] : memref<1x1xf32, #tpu.memory_space<vmem>>, vector<1x1xf32>
    %17 = arith.mulf %15, %7 : vector<2x1xf32>
    %cst_11 = arith.constant dense<0.000000e+00> : vector<1xf32>
    %18 = vector.multi_reduction <add>, %17, %cst_11 [0] : vector<2x1xf32> to vector<1xf32>
    %19 = vector.shape_cast %18 : vector<1xf32> to vector<1x1xf32>
    %20 = arith.addf %16, %19 : vector<1x1xf32>
    %c0_12 = arith.constant 0 : index
    %c0_13 = arith.constant 0 : index
    %21 = vector.load %arg5[%c0_12, %c0_13] : memref<1x1xf32, #tpu.memory_space<vmem>>, vector<1x1xf32>
    tpu.vector_store %arg5[%c0_12, %c0_13], %20 {strides = array<i32>} : memref<1x1xf32, #tpu.memory_space<vmem>>, vector<1x1xf32>,
    return
  }
  func.func @transform_0(%arg0: i32, %arg1: i32) -> (i32, i32) {
    %c0_i32 = arith.constant 0 : i32
    return %arg0, %arg1 : i32, i32
  }
  func.func @transform_1(%arg0: i32, %arg1: i32) -> (i32, i32) {
    %c0_i32 = arith.constant 0 : i32
    return %arg0, %arg1 : i32, i32
  }
  func.func @transform_2(%arg0: i32, %arg1: i32) -> (i32, i32) {
    %c0_i32 = arith.constant 0 : i32
    %c0_i32_0 = arith.constant 0 : i32
    return %arg0, %c0_i32 : i32, i32
  }
  func.func @transform_3(%arg0: i32, %arg1: i32) -> (i32, i32) {
    %c0_i32 = arith.constant 0 : i32
    %c0_i32_0 = arith.constant 0 : i32
    %c0_i32_1 = arith.constant 0 : i32
    return %c0_i32, %c0_i32_0 : i32, i32
  }
}

</mosaic_0001>

<llo_original>
// kernel: tpu_custom_call.1
$region0: #{tpu_custom_call.1}
  #allocation0 [shape = 'u32[]', space=smem, size = 0x4, offset = 0x4, fixed_abs, tag = 'smem constant byte address 0x4 - core index']
  #allocation1 [shape = 'u32[144,128]{1,0:T(1,128)}', space=vmem, size = 0x12000, scoped, tag = 'internal scratch']
  %s0 = inlined_call_operand.hbm [shape: f32[2,256], index: 0, kind: input, shape index: {}]
  %s1 = inlined_call_operand.vmem [shape: f32[2,256], index: 1, kind: input, shape index: {}]
  %s2 = inlined_call_operand.vmem [shape: f32[2,1], index: 2, kind: input, shape index: {}]
  %s3 = inlined_call_operand.hbm [shape: f32[1,1], index: 3, kind: output, shape index: {}]
  %s4 = sld [smem:[#allocation0]]
  $region30: #{tpu_custom_call.1} parent=0
    _
  %s6 = ssub.s32 1, %s4
  %s7 = scalar_select 0, %s6, %s4
  $region1: #{tpu_custom_call.1} parent=0
    #allocation2 [shape = 'u8[2048]{0}', space=vmem, size = 0x800, scoped, tag = 'input window, operand 0, single buffered']
    #allocation3 [shape = 's32[1]{0}', space=sflag, size = 0x4, scoped, tag = 'scoped memory for tpu_custom_call.1']
    #allocation4 [shape = 's32[1]{0}', space=sflag, size = 0x4, scoped, tag = 'scoped memory for tpu_custom_call.1']
    #allocation5 [shape = 'u8[512]{0}', space=vmem, size = 0x400, scoped, tag = 'output window, operand 0, single buffered']
    %8 = vsyncpa [#allocation3], 0
    %9 = vsyncpa [#allocation4], 0
    // Predicated region
    $region2: #{tpu_custom_call.1} parent=1 // pred_check
      _
    $region3: #{tpu_custom_call.1} parent=1 // pred_check_branch
      %11 = sbr.rel (0) target = $region5
    $region4: #{tpu_custom_call.1} parent=1 // pred_region
      %s13 = ssub.s32 64, 64
      %14 = vsyncadd [#allocation3], %s13
      %s16 = sshll.u32 [#allocation2], 4
      %s17 = int_to_ptr.vmem [resolvable:$true] %s16
      %19 = dma.hbm_to_vmem [thread:$0]  %s0, 64, %s17, [#allocation3]
    $region5: #{tpu_custom_call.1} parent=1 // pred_fallthru
      _
    // Predicated region
    $region6: #{tpu_custom_call.1} parent=1 // pred_check
      _
    $region7: #{tpu_custom_call.1} parent=1 // pred_check_branch
      %21 = sbr.rel (0) target = $region9
    $region8: #{tpu_custom_call.1} parent=1 // pred_region
      _
    $region9: #{tpu_custom_call.1} parent=1 // pred_fallthru
      _
    // Predicated region
    $region10: #{tpu_custom_call.1} parent=1 // pred_check
      _
    $region11: #{tpu_custom_call.1} parent=1 // pred_check_branch
      %23 = sbr.rel (0) target = $region13
    $region12: #{tpu_custom_call.1} parent=1 // pred_region
      _
    $region13: #{tpu_custom_call.1} parent=1 // pred_fallthru
      _
    // Predicated region
    $region14: #{tpu_custom_call.1} parent=1 // pred_check
      _
    $region15: #{tpu_custom_call.1} parent=1 // pred_check_branch
      %25 = sbr.rel (0) target = $region17
    $region16: #{tpu_custom_call.1} parent=1 // pred_region
      %26 = dma.done [#allocation3], 64
    $region17: #{tpu_custom_call.1} parent=1 // pred_fallthru
      _
    %p27 = scmp.eq.s32.totalorder 0, 0
    %p28 = scmp.eq.s32.totalorder 0, 0
    %p29 = pnand %p27, %p28
    %p30 = pneg %p29
    // Predicated region
    $region18: #{tpu_custom_call.1} parent=1 // pred_check
      _
    $region19: #{tpu_custom_call.1} parent=1 // pred_check_branch
      %32 = sbr.rel (%p29) target = $region21
    $region20: #{tpu_custom_call.1} parent=1 // pred_region
      %vm33 = vcmask 0
      %34 = vst.msk [vmem:[#allocation5] sm:$0x1] %vm33, 0.0
    $region21: #{tpu_custom_call.1} parent=1 // pred_fallthru
      _
    %v35 = vld [vmem:[#allocation2] sm:$0xf]
    %v36 = vld [vmem:[%s1] sm:$0xf]
    %v37 = vld [vmem:[%s2] sm:$0x3]
    %vm38 = vcmp.eq.f32.partialorder %v36, -1.0
    %v39 = vsub.f32 %v35, %v36
    %v40 = vand.u32 2147483647, %v39
    %v41 = vsel %vm38, 0.0, %v40
    %v44 = vunpack.c.l.s4 1983009808
    %v45 = vunpack.c.0.s8 %v44
    %v46 = vlaneseq
    %v47 = vshrl.u32 %v46, 7
    %v48 = vsub.s32 %v45, %v47
    %v49 = vrot.slane %v41, %v48
    %v50 = vcombine.high %v49, %v49
    %vm53 = vcmask 1041408
    %v54 = vsel %vm53, %v49, 0.0
    %v55 = vsel %vm53, %v50, 0.0
    %v56 = vadd.f32 %v54, %v55
    %57 = vadd.xlane.f32.xlu0 %v56
    %v58 = vpop.xlane.xlu0 %57
    %v59 = vld [vmem:[#allocation5] sm:$0x1]
    %v60 = vmul.f32 %v58, %v37
    %vm61 = vcmask 1024
    %v62 = vsel %vm61, %v60, 0.0
    %v63 = vrot.slane %v62, 4
    %v64 = vadd.f32 %v62, %v63
    %v65 = vrot.slane %v64, 2
    %v66 = vadd.f32 %v64, %v65
    %v67 = vrot.slane %v66, 1
    %v68 = vadd.f32 %v66, %v67
    %v69 = vadd.f32 %v59, %v68
    %vm70 = vcmask 0
    %71 = vst.msk [vmem:[#allocation5] sm:$0x1] %vm70, %v69
    // Predicated region
    $region22: #{tpu_custom_call.1} parent=1 // pred_check
      _
    $region23: #{tpu_custom_call.1} parent=1 // pred_check_branch
      %73 = sbr.rel (0) target = $region25
    $region24: #{tpu_custom_call.1} parent=1 // pred_region
      %s75 = ssub.s32 16, 16
      %76 = vsyncadd [#allocation4], %s75
      %s78 = sshll.u32 [#allocation5], 4
      %s79 = int_to_ptr.vmem [resolvable:$true] %s78
      %81 = dma.vmem_to_hbm [thread:$0]  %s79, 16, %s3, [#allocation4]
    $region25: #{tpu_custom_call.1} parent=1 // pred_fallthru
      _
    // Predicated region
    $region26: #{tpu_custom_call.1} parent=1 // pred_check
      _
    $region27: #{tpu_custom_call.1} parent=1 // pred_check_branch
      %83 = sbr.rel (0) target = $region29
    $region28: #{tpu_custom_call.1} parent=1 // pred_region
      %84 = dma.done [#allocation4], 16
    $region29: #{tpu_custom_call.1} parent=1 // pred_fallthru
      _
    %85 = vsyncpa [#allocation3], 1
    %86 = vsyncpa [#allocation4], 1

</llo_original>
